<compile_context>
chip_gen: v7x
topology: tpu7x:2x2x1
jax: 0.10.0
libtpu: 0.0.40
codegen_flags: <defaults>
</compile_context>

<pallas_src>
import jax
import jax.numpy as jnp
from jax.experimental import pallas as pl
from jax.experimental.pallas import tpu as pltpu

LANE = 128
SUBLANE = 8


def _round_up(x, m):
    return (x + m - 1) // m * m


def _cdiv(a, b):
    return (a + b - 1) // b


# ---------------------------------------------------------------------------
# Fused kernel: folded visual projection + L2 normalize + scaled CLIP logits
# ---------------------------------------------------------------------------
def zsclip_fused_kernel(x_ref, w_ref, b_ref, txt_ref, out_ref):
    """One grid step = one batch tile.

    x_ref:   [Bt, Dp]   bf16  mean-pooled patch vectors
    w_ref:   [Dp, D]    bf16  pre-folded W_patch @ W_proj
    b_ref:   [1, D]     f32   pre-folded b_patch @ W_proj
    txt_ref: [D, Kpad]  bf16  (exp(logit_scale) * normalized text).T, K->128 pad
    out_ref: [Bt, Kpad] f32   logits (lane-dense)
    """
    # Projection: one dense MXU matmul, f32 accumulate.
    feat = jnp.dot(x_ref[...], w_ref[...],
                   preferred_element_type=jnp.float32)                 # [Bt, D]
    feat = feat + b_ref[...]

    # L2 normalization (eps guards zero-padded batch rows against inf/NaN).
    inv_norm = jax.lax.rsqrt(
        jnp.sum(feat * feat, axis=-1, keepdims=True) + 1e-12)
    xn = (feat * inv_norm).astype(jnp.bfloat16)                        # [Bt, D]

    # Scaled logits: plain [Bt,D] @ [D,Kpad] (scale folded into txt at init).
    out_ref[...] = jnp.dot(xn, txt_ref[...],
                           preferred_element_type=jnp.float32)         # [Bt, Kpad]


# ---------------------------------------------------------------------------
# Glue / wrappers
# ---------------------------------------------------------------------------
def mean_pool_patches(image, patch):
    """NCHW image -> [B, C*patch*patch] mean over the patch grid.

    Exact pool-first rewrite of (im2col -> patch matmul -> mean over patches):
    pooled[b, (c,i,j)] = mean_{ph,pw} image[b, c, ph*patch+i, pw*patch+j].
    """
    B, C, H, W = image.shape
    ph, pw = H // patch, W // patch
    x = image.astype(jnp.float32).reshape(B, C, ph, patch, pw, patch)
    pooled = x.mean(axis=(2, 4))                      # [B, C, patch, patch]
    return pooled.reshape(B, C * patch * patch)       # [B, Dp], (C, p, p) order


def extract_patches_nchw(image, patch):
    """Reference-only im2col: NCHW -> [B, num_patches, C*patch*patch]."""
    B, C, H, W = image.shape
    ph, pw = H // patch, W // patch
    x = image.reshape(B, C, ph, patch, pw, patch)
    x = jnp.transpose(x, (0, 2, 4, 1, 3, 5))          # [B, ph, pw, C, p, p]
    return x.reshape(B, ph * pw, C * patch * patch)


def prepare_params(patch, w_patch, b_patch, w_proj, text_features, logit_scale):
    """One-time init-side folding of frozen constants (exact, all ops linear)."""
    w_fused = w_patch @ w_proj                         # [Dp, D]
    b_fused = (b_patch @ w_proj)[None, :]              # [1, D]
    txt_scaled = jnp.exp(logit_scale) * text_features  # [K, D]
    K, D = txt_scaled.shape
    k_pad = _round_up(K, LANE)                         # lane-dense output slab
    txt_t = jnp.zeros((D, k_pad), jnp.float32).at[:, :K].set(txt_scaled.T)
    return dict(
        patch=patch,
        w_fused=w_fused.astype(jnp.bfloat16),
        b_fused=b_fused.astype(jnp.float32),
        txt_t=txt_t.astype(jnp.bfloat16),              # pre-transposed [D, Kpad]
        num_classes=K,
    )


def _choose_b_tile(B, cap):
    """Pick a batch tile <= cap (multiple of 8) with <8 rows of padding waste
    per tile (split the batch into near-equal tiles for awkward B)."""
    cap = max(SUBLANE, _round_up(cap, SUBLANE))
    b8 = _round_up(B, SUBLANE)
    if b8 <= cap:
        return b8
    n_tiles = _cdiv(b8, cap)
    return _round_up(_cdiv(b8, n_tiles), SUBLANE)


def zsclip_twice_forward(image, params, *, b_tile=128, vmem_limit_bytes=None):
    """Full forward: pool-first encoder fold -> fused projection/normalize/logits."""
    pooled = mean_pool_patches(image, params["patch"]).astype(jnp.bfloat16)
    B, Dp = pooled.shape
    w, b, txt_t = params["w_fused"], params["b_fused"], params["txt_t"]
    D = w.shape[1]
    k_pad = txt_t.shape[1]
    K = params["num_classes"]

    bt = _choose_b_tile(B, b_tile)
    Bp = _round_up(B, bt)
    if Bp != B:
        pooled = jnp.pad(pooled, ((0, Bp - B), (0, 0)))

    if vmem_limit_bytes is None:
        # Double-buffered in/out tiles + (double-buffered) folded weights + margin.
        foot = (2 * bt * Dp * 2                               # pooled tiles (bf16)
                + 2 * bt * k_pad * 4                          # output tiles (f32)
                + 2 * (Dp * D * 2 + D * 4 + D * k_pad * 2)    # w / b / txt
                + (4 << 20))
        vmem_limit_bytes = min(max(foot, 32 << 20), 56 << 20)  # safe on v7x 64 MiB

    grid = (Bp // bt,)
    logits = pl.pallas_call(
        zsclip_fused_kernel,
        out_shape=jax.ShapeDtypeStruct((Bp, k_pad), jnp.float32),
        grid_spec=pltpu.PrefetchScalarGridSpec(
            num_scalar_prefetch=0,
            grid=grid,
            in_specs=[
                pl.BlockSpec((bt, Dp), lambda i: (i, 0)),     # pooled patches
                pl.BlockSpec((Dp, D), lambda i: (0, 0)),      # W_fused (invariant)
                pl.BlockSpec((1, D), lambda i: (0, 0)),       # b_fused (invariant)
                pl.BlockSpec((D, k_pad), lambda i: (0, 0)),   # text.T   (invariant)
            ],
            out_specs=pl.BlockSpec((bt, k_pad), lambda i: (i, 0)),
        ),
        compiler_params=pltpu.CompilerParams(
            dimension_semantics=("parallel",),    # megacore sharding on v7x
            vmem_limit_bytes=int(vmem_limit_bytes),
        ),
    )(pooled, w, b, txt_t)
    return logits[:B, :K]


# ---------------------------------------------------------------------------
# References for correctness checks
# ---------------------------------------------------------------------------
def reference_forward(image, w_patch, b_patch, w_proj, text_features,
                      logit_scale, patch):
    """Exact f32 reference of the un-folded module semantics."""
    patches = extract_patches_nchw(image.astype(jnp.float32), patch)
    h = jnp.einsum("bpd,dw->bpw", patches, w_patch) + b_patch
    pooled = jnp.mean(h, axis=1)
    feat = pooled @ w_proj
    feat = feat / jnp.linalg.norm(feat, axis=-1, keepdims=True)
    return jnp.exp(logit_scale) * feat @ text_features.T


def matched_reference(image, params):
    """Pure-JAX reference using the same folding / bf16 precision as the kernel."""
    pooled = mean_pool_patches(image, params["patch"]).astype(jnp.bfloat16)
    feat = jnp.dot(pooled, params["w_fused"],
                   preferred_element_type=jnp.float32) + params["b_fused"]
    xn = feat * jax.lax.rsqrt(jnp.sum(feat * feat, axis=-1, keepdims=True) + 1e-12)
    logits = jnp.dot(xn.astype(jnp.bfloat16), params["txt_t"],
                     preferred_element_type=jnp.float32)
    return logits[:, :params["num_classes"]]


if __name__ == "__main__":
    # Small shapes consistent with the module's forward.
    B, C, H, W = 16, 4, 16, 16
    patch = 8
    width = 128            # visual hidden width
    embed_dim = 128        # CLIP embedding dim
    num_prompts = 8        # number of class prompts (text_features rows)

    key = jax.random.PRNGKey(0)
    k_img, k_wp, k_bp, k_pr, k_txt = jax.random.split(key, 5)

    image = jax.random.normal(k_img, (B, C, H, W), dtype=jnp.float32)

    Dp = C * patch * patch
    w_patch = jax.random.normal(k_wp, (Dp, width), dtype=jnp.float32) * 0.02
    b_patch = jax.random.normal(k_bp, (width,), dtype=jnp.float32) * 0.02
    w_proj = jax.random.normal(k_pr, (width, embed_dim), dtype=jnp.float32) * 0.02

    # __init__-time constants: pre-normalized text features + CLIP logit scale.
    # TODO(synk): real module would run the frozen CLIP text encoder here.
    txt = jax.random.normal(k_txt, (num_prompts, embed_dim), dtype=jnp.float32)
    text_features = txt / jnp.linalg.norm(txt, axis=-1, keepdims=True)
    logit_scale = jnp.asarray(jnp.log(1.0 / 0.07), dtype=jnp.float32)

    params = prepare_params(patch, w_patch, b_patch, w_proj,
                            text_features, logit_scale)

    # Main run: default b_tile (batch fits one full tile).
    logits = zsclip_twice_forward(image, params)
    logits = jax.block_until_ready(logits)
    assert logits.shape == (B, num_prompts)

    # Tight check vs a precision-matched (bf16 operands / f32 acc) reference.
    ref_match = matched_reference(image, params)
    err_m = float(jnp.max(jnp.abs(logits - ref_match)))
    assert jnp.allclose(logits, ref_match, atol=2e-2, rtol=2e-2), err_m

    # Looser check vs the exact f32 un-folded module semantics
    # (difference is only bf16 operand rounding).
    ref_exact = reference_forward(image, w_patch, b_patch, w_proj,
                                  text_features, logit_scale, patch)
    err_e = float(jnp.max(jnp.abs(logits - ref_exact)))
    assert jnp.allclose(logits, ref_exact, atol=2.5e-1, rtol=5e-2), err_e

    # Multi-step grid path (b_tile=8 -> grid=(2,), "parallel" batch axis).
    logits_multi = jax.block_until_ready(
        zsclip_twice_forward(image, params, b_tile=8))
    assert jnp.allclose(logits_multi, logits, atol=1e-5, rtol=1e-5)

    # Ragged-batch / padding path (B=2 padded up to one 8-row tile).
    logits_small = jax.block_until_ready(
        zsclip_twice_forward(image[:2], params))
    assert logits_small.shape == (2, num_prompts)
    assert jnp.allclose(logits_small, logits[:2], atol=1e-5, rtol=1e-5)

    print("KERNEL_OK")
</pallas_src>

<mosaic_0001>
module attributes {stable_mosaic.version = 11 : i64} {
  func.func @zsclip_fused_kernel(%arg0: i32, %arg1: memref<16x256xbf16, #tpu.memory_space<vmem>>, %arg2: memref<256x128xbf16, #tpu.memory_space<vmem>>, %arg3: memref<1x128xf32, #tpu.memory_space<vmem>>, %arg4: memref<128x128xbf16, #tpu.memory_space<vmem>>, %arg5: memref<16x128xf32, #tpu.memory_space<vmem>>) attributes {dimension_semantics = [#tpu.dimension_semantics<parallel>], iteration_bounds = array<i64: 1>, scalar_prefetch = 0 : i64, scratch_operands = 0 : i64, tpu.core_type = #tpu.core_type<tc>, window_params = [{transform_indices = @transform_0, window_bounds = array<i64: 16, 256>}, {pipeline_mode = #tpu.pipeline_mode<synchronous>, transform_indices = @transform_1, window_bounds = array<i64: 256, 128>}, {pipeline_mode = #tpu.pipeline_mode<synchronous>, transform_indices = @transform_2, window_bounds = array<i64: 1, 128>}, {pipeline_mode = #tpu.pipeline_mode<synchronous>, transform_indices = @transform_3, window_bounds = array<i64: 128, 128>}, {transform_indices = @transform_4, window_bounds = array<i64: 16, 128>}]} {
    %c0 = arith.constant 0 : index
    %c0_0 = arith.constant 0 : index
    %0 = vector.load %arg1[%c0, %c0_0] : memref<16x256xbf16, #tpu.memory_space<vmem>>, vector<16x256xbf16>
    %c0_1 = arith.constant 0 : index
    %c0_2 = arith.constant 0 : index
    %1 = vector.load %arg2[%c0_1, %c0_2] : memref<256x128xbf16, #tpu.memory_space<vmem>>, vector<256x128xbf16>
    %cst = arith.constant dense<0.000000e+00> : vector<16x128xf32>
    %2 = tpu.matmul %0, %1, %cst {dimension_numbers = #tpu.dot_dimension_numbers<[1], [0], [0], [1], [0, 0, 1, 1], [], []>} : vector<16x256xbf16>, vector<256x128xbf16>, vector<16x128xf32> -> vector<16x128xf32>
    %c0_3 = arith.constant 0 : index
    %c0_4 = arith.constant 0 : index
    %3 = vector.load %arg3[%c0_3, %c0_4] : memref<1x128xf32, #tpu.memory_space<vmem>>, vector<1x128xf32>
    %4 = vector.broadcast %3 : vector<1x128xf32> to vector<16x128xf32>
    %5 = arith.addf %2, %4 : vector<16x128xf32>
    %6 = arith.mulf %5, %5 : vector<16x128xf32>
    %cst_5 = arith.constant dense<0.000000e+00> : vector<16xf32>
    %7 = vector.multi_reduction <add>, %6, %cst_5 [1] : vector<16x128xf32> to vector<16xf32>
    %8 = vector.shape_cast %7 : vector<16xf32> to vector<16x1xf32>
    %cst_6 = arith.constant 9.99999996E-13 : f32
    %9 = vector.broadcast %cst_6 : f32 to vector<16x1xf32>
    %10 = arith.addf %8, %9 : vector<16x1xf32>
    %11 = math.rsqrt %10 : vector<16x1xf32>
    %12 = vector.broadcast %11 : vector<16x1xf32> to vector<16x128xf32>
    %13 = arith.mulf %5, %12 : vector<16x128xf32>
    %14 = arith.truncf %13 : vector<16x128xf32> to vector<16x128xbf16>
    %c0_7 = arith.constant 0 : index
    %c0_8 = arith.constant 0 : index
    %15 = vector.load %arg4[%c0_7, %c0_8] : memref<128x128xbf16, #tpu.memory_space<vmem>>, vector<128x128xbf16>
    %cst_9 = arith.constant dense<0.000000e+00> : vector<16x128xf32>
    %16 = tpu.matmul %14, %15, %cst_9 {dimension_numbers = #tpu.dot_dimension_numbers<[1], [0], [0], [1], [0, 0, 1, 1], [], []>} : vector<16x128xbf16>, vector<128x128xbf16>, vector<16x128xf32> -> vector<16x128xf32>
    %c0_10 = arith.constant 0 : index
    %c0_11 = arith.constant 0 : index
    %17 = vector.load %arg5[%c0_10, %c0_11] : memref<16x128xf32, #tpu.memory_space<vmem>>, vector<16x128xf32>
    tpu.vector_store %arg5[%c0_10, %c0_11], %16 {strides = array<i32>} : memref<16x128xf32, #tpu.memory_space<vmem>>, vector<16x128xf32>,
    return
  }
  func.func @transform_0(%arg0: i32) -> (i32, i32) {
    %c0_i32 = arith.constant 0 : i32
    %c0_i32_0 = arith.constant 0 : i32
    return %arg0, %c0_i32 : i32, i32
  }
  func.func @transform_1(%arg0: i32) -> (i32, i32) {
    %c0_i32 = arith.constant 0 : i32
    %c0_i32_0 = arith.constant 0 : i32
    %c0_i32_1 = arith.constant 0 : i32
    return %c0_i32, %c0_i32_0 : i32, i32
  }
  func.func @transform_2(%arg0: i32) -> (i32, i32) {
    %c0_i32 = arith.constant 0 : i32
    %c0_i32_0 = arith.constant 0 : i32
    %c0_i32_1 = arith.constant 0 : i32
    return %c0_i32, %c0_i32_0 : i32, i32
  }
  func.func @transform_3(%arg0: i32) -> (i32, i32) {
    %c0_i32 = arith.constant 0 : i32
    %c0_i32_0 = arith.constant 0 : i32
    %c0_i32_1 = arith.constant 0 : i32
    return %c0_i32, %c0_i32_0 : i32, i32
  }
  func.func @transform_4(%arg0: i32) -> (i32, i32) {
    %c0_i32 = arith.constant 0 : i32
    %c0_i32_0 = arith.constant 0 : i32
    return %arg0, %c0_i32 : i32, i32
  }
}

</mosaic_0001>

<llo_original>
// kernel: tpu_custom_call.1
$region0: #{tpu_custom_call.1}
  #allocation0 [shape = 'u32[]', space=smem, size = 0x4, offset = 0x4, fixed_abs, tag = 'smem constant byte address 0x4 - core index']
  #allocation1 [shape = 'u32[144,128]{1,0:T(1,128)}', space=vmem, size = 0x12000, scoped, tag = 'internal scratch']
  %s0 = inlined_call_operand.hbm [shape: bf16[16,256], index: 0, kind: input, shape index: {}]
  %s1 = inlined_call_operand.hbm [shape: bf16[256,128], index: 1, kind: input, shape index: {}]
  %s2 = inlined_call_operand.vmem [shape: f32[1,128], index: 2, kind: input, shape index: {}]
  %s3 = inlined_call_operand.hbm [shape: bf16[128,128], index: 3, kind: input, shape index: {}]
  %s4 = inlined_call_operand.hbm [shape: f32[16,128], index: 4, kind: output, shape index: {}]
  %s5 = sld [smem:[#allocation0]]
  $region38: #{tpu_custom_call.1} parent=0
    _
  %s7 = ssub.s32 1, %s5
  %s8 = scalar_select 0, %s7, %s5
  $region1: #{tpu_custom_call.1} parent=0
    #allocation2 [shape = 'u8[8192]{0}', space=vmem, size = 0x2000, scoped, tag = 'input window, operand 0, single buffered']
    #allocation3 [shape = 's32[1]{0}', space=sflag, size = 0x4, scoped, tag = 'scoped memory for tpu_custom_call.1']
    #allocation4 [shape = 's32[1]{0}', space=sflag, size = 0x4, scoped, tag = 'scoped memory for tpu_custom_call.1']
    #allocation5 [shape = 'u8[65536]{0}', space=vmem, size = 0x10000, scoped, tag = 'input window, operand 1, single buffered']
    #allocation6 [shape = 's32[1]{0}', space=sflag, size = 0x4, scoped, tag = 'scoped memory for tpu_custom_call.1']
    #allocation7 [shape = 'u8[32768]{0}', space=vmem, size = 0x8000, scoped, tag = 'input window, operand 3, single buffered']
    #allocation8 [shape = 'u8[8192]{0}', space=vmem, size = 0x2000, scoped, tag = 'output window, operand 0, single buffered']
    %9 = vsyncpa [#allocation3], 0
    %10 = vsyncpa [#allocation6], 0
    %11 = vsyncpa [#allocation4], 0
    // Predicated region
    $region2: #{tpu_custom_call.1} parent=1 // pred_check
      _
    $region3: #{tpu_custom_call.1} parent=1 // pred_check_branch
      %13 = sbr.rel (0) target = $region5
    $region4: #{tpu_custom_call.1} parent=1 // pred_region
      %s15 = ssub.s32 256, 256
      %16 = vsyncadd [#allocation3], %s15
      %s17 = sshll.u32 [#allocation2], 4
      %s18 = int_to_ptr.vmem [resolvable:$true] %s17
      %23 = dma.hbm_to_vmem [thread:$0]  %s0, 256, %s18, [#allocation3], 128, 128, 8
    $region5: #{tpu_custom_call.1} parent=1 // pred_fallthru
      _
    // Predicated region
    $region6: #{tpu_custom_call.1} parent=1 // pred_check
      _
    $region7: #{tpu_custom_call.1} parent=1 // pred_check_branch
      %25 = sbr.rel (0) target = $region9
    $region8: #{tpu_custom_call.1} parent=1 // pred_region
      %s27 = ssub.s32 2048, 2048
      %28 = vsyncadd [#allocation6], %s27
      %s29 = sshll.u32 [#allocation5], 4
      %s30 = int_to_ptr.vmem [resolvable:$true] %s29
      %35 = dma.hbm_to_vmem [thread:$0]  %s1, 2048, %s30, [#allocation6], 64, 64, 4
    $region9: #{tpu_custom_call.1} parent=1 // pred_fallthru
      _
    // Predicated region
    $region10: #{tpu_custom_call.1} parent=1 // pred_check
      _
    $region11: #{tpu_custom_call.1} parent=1 // pred_check_branch
      %37 = sbr.rel (0) target = $region13
    $region12: #{tpu_custom_call.1} parent=1 // pred_region
      _
    $region13: #{tpu_custom_call.1} parent=1 // pred_fallthru
      _
    // Predicated region
    $region14: #{tpu_custom_call.1} parent=1 // pred_check
      _
    $region15: #{tpu_custom_call.1} parent=1 // pred_check_branch
      %39 = sbr.rel (0) target = $region17
    $region16: #{tpu_custom_call.1} parent=1 // pred_region
      %s41 = ssub.s32 1024, 1024
      %42 = vsyncadd [#allocation6], %s41
      %s43 = sshll.u32 [#allocation7], 4
      %s44 = int_to_ptr.vmem [resolvable:$true] %s43
      %49 = dma.hbm_to_vmem [thread:$0]  %s3, 1024, %s44, [#allocation6], 64, 64, 4
    $region17: #{tpu_custom_call.1} parent=1 // pred_fallthru
      _
    // Predicated region
    $region18: #{tpu_custom_call.1} parent=1 // pred_check
      _
    $region19: #{tpu_custom_call.1} parent=1 // pred_check_branch
      %51 = sbr.rel (0) target = $region21
    $region20: #{tpu_custom_call.1} parent=1 // pred_region
      %52 = dma.done [#allocation3], 256
    $region21: #{tpu_custom_call.1} parent=1 // pred_fallthru
      _
    // Predicated region
    $region22: #{tpu_custom_call.1} parent=1 // pred_check
      _
    $region23: #{tpu_custom_call.1} parent=1 // pred_check_branch
      %54 = sbr.rel (0) target = $region25
    $region24: #{tpu_custom_call.1} parent=1 // pred_region
      %55 = dma.done [#allocation6], 2048
    $region25: #{tpu_custom_call.1} parent=1 // pred_fallthru
      _
    // Predicated region
    $region26: #{tpu_custom_call.1} parent=1 // pred_check
      _
    $region27: #{tpu_custom_call.1} parent=1 // pred_check_branch
      %57 = sbr.rel (0) target = $region29
    $region28: #{tpu_custom_call.1} parent=1 // pred_region
      %58 = dma.done [#allocation6], 1024
    $region29: #{tpu_custom_call.1} parent=1 // pred_fallthru
      _
    %v60 = vld [vmem:[#allocation2] sm:$0xff]
    %v61 = vld [vmem:[#allocation2 + $0x8] sm:$0xff]
    %v62 = vld [vmem:[#allocation5] sm:$0xf]
    %v63 = vld [vmem:[#allocation5 + $0x4] sm:$0xf]
    %v64 = vld [vmem:[#allocation5 + $0x8] sm:$0xf]
    %v65 = vld [vmem:[#allocation5 + $0xc] sm:$0xf]
    %v66 = vld [vmem:[#allocation5 + $0x10] sm:$0xf]
    %v67 = vld [vmem:[#allocation5 + $0x14] sm:$0xf]
    %v68 = vld [vmem:[#allocation5 + $0x18] sm:$0xf]
    %v69 = vld [vmem:[#allocation5 + $0x1c] sm:$0xf]
    %v70 = vld [vmem:[#allocation5 + $0x20] sm:$0xf]
    %v71 = vld [vmem:[#allocation5 + $0x24] sm:$0xf]
    %v72 = vld [vmem:[#allocation5 + $0x28] sm:$0xf]
    %v73 = vld [vmem:[#allocation5 + $0x2c] sm:$0xf]
    %v74 = vld [vmem:[#allocation5 + $0x30] sm:$0xf]
    %v75 = vld [vmem:[#allocation5 + $0x34] sm:$0xf]
    %v76 = vld [vmem:[#allocation5 + $0x38] sm:$0xf]
    %v77 = vld [vmem:[#allocation5 + $0x3c] sm:$0xf]
    %v78 = vld [vmem:[#allocation5 + $0x40] sm:$0xf]
    %v79 = vld [vmem:[#allocation5 + $0x44] sm:$0xf]
    %v80 = vld [vmem:[#allocation5 + $0x48] sm:$0xf]
    %v81 = vld [vmem:[#allocation5 + $0x4c] sm:$0xf]
    %v82 = vld [vmem:[#allocation5 + $0x50] sm:$0xf]
    %v83 = vld [vmem:[#allocation5 + $0x54] sm:$0xf]
    %v84 = vld [vmem:[#allocation5 + $0x58] sm:$0xf]
    %v85 = vld [vmem:[#allocation5 + $0x5c] sm:$0xf]
    %v86 = vld [vmem:[#allocation5 + $0x60] sm:$0xf]
    %v87 = vld [vmem:[#allocation5 + $0x64] sm:$0xf]
    %v88 = vld [vmem:[#allocation5 + $0x68] sm:$0xf]
    %v89 = vld [vmem:[#allocation5 + $0x6c] sm:$0xf]
    %v90 = vld [vmem:[#allocation5 + $0x70] sm:$0xf]
    %v91 = vld [vmem:[#allocation5 + $0x74] sm:$0xf]
    %v92 = vld [vmem:[#allocation5 + $0x78] sm:$0xf]
    %v93 = vld [vmem:[#allocation5 + $0x7c] sm:$0xf]
    %v94 = vld [vmem:[%s2] sm:$0x1]
    %v96 = vlaneseq
    %v97 = vshrl.u32 %v96, 7
    %v98 = vsub.s32 0, %v97
    %v99 = vrot.slane %v94, %v98
    %v103 = vunpack.c.l.b16 %v60
    %v104 = vunpack.c.h.b16 %v60
    %v105 = vunpack.c.l.b16 %v61
    %v106 = vunpack.c.h.b16 %v61
    %v107 = vpack.c.b16 %v105, %v103
    %v108 = vpack.c.b16 %v106, %v104
    %v143 = vunpack.c.l.b16 %v62
    %v144 = vunpack.c.l.b16 %v63
    %v145 = vunpack.c.l.b16 %v64
    %v146 = vunpack.c.l.b16 %v65
    %v147 = vunpack.c.l.b16 %v66
    %v148 = vunpack.c.l.b16 %v67
    %v149 = vunpack.c.l.b16 %v68
    %v150 = vunpack.c.l.b16 %v69
    %v151 = vunpack.c.l.b16 %v70
    %v152 = vunpack.c.l.b16 %v71
    %v153 = vunpack.c.l.b16 %v72
    %v154 = vunpack.c.l.b16 %v73
    %v155 = vunpack.c.l.b16 %v74
    %v156 = vunpack.c.l.b16 %v75
    %v157 = vunpack.c.l.b16 %v76
    %v158 = vunpack.c.l.b16 %v77
    %v159 = vunpack.c.l.b16 %v78
    %v160 = vunpack.c.l.b16 %v79
    %v161 = vunpack.c.l.b16 %v80
    %v162 = vunpack.c.l.b16 %v81
    %v163 = vunpack.c.l.b16 %v82
    %v164 = vunpack.c.l.b16 %v83
    %v165 = vunpack.c.l.b16 %v84
    %v166 = vunpack.c.l.b16 %v85
    %v167 = vunpack.c.l.b16 %v86
    %v168 = vunpack.c.l.b16 %v87
    %v169 = vunpack.c.l.b16 %v88
    %v170 = vunpack.c.l.b16 %v89
    %v171 = vunpack.c.l.b16 %v90
    %v172 = vunpack.c.l.b16 %v91
    %v173 = vunpack.c.l.b16 %v92
    %v174 = vunpack.c.l.b16 %v93
    %v175 = vpack.c.b16 %v144, %v143
    %v176 = vpack.c.b16 %v146, %v145
    %v177 = vpack.c.b16 %v148, %v147
    %v178 = vpack.c.b16 %v150, %v149
    %v179 = vpack.c.b16 %v152, %v151
    %v180 = vpack.c.b16 %v154, %v153
    %v181 = vpack.c.b16 %v156, %v155
    %v182 = vpack.c.b16 %v158, %v157
    %v183 = vpack.c.b16 %v160, %v159
    %v184 = vpack.c.b16 %v162, %v161
    %v185 = vpack.c.b16 %v164, %v163
    %v186 = vpack.c.b16 %v166, %v165
    %v187 = vpack.c.b16 %v168, %v167
    %v188 = vpack.c.b16 %v170, %v169
    %v189 = vpack.c.b16 %v172, %v171
    %v190 = vpack.c.b16 %v174, %v173
    %207 = vmatprep.subr.bf16.mxu0 0
    %208 = vmatpush1.bf16.msra.mxu0 %v175
    %209 = vmatprep.subr.bf16.mxu0 0
    %210 = vmatpush1.bf16.msra.mxu0 %v176
    %211 = vmatprep.subr.bf16.mxu0 0
    %212 = vmatpush1.bf16.msra.mxu0 %v177
    %213 = vmatprep.subr.bf16.mxu0 0
    %214 = vmatpush1.bf16.msra.mxu0 %v178
    %215 = vmatprep.subr.bf16.mxu0 0
    %216 = vmatpush1.bf16.msra.mxu0 %v179
    %217 = vmatprep.subr.bf16.mxu0 0
    %218 = vmatpush1.bf16.msra.mxu0 %v180
    %219 = vmatprep.subr.bf16.mxu0 0
    %220 = vmatpush1.bf16.msra.mxu0 %v181
    %221 = vmatprep.subr.bf16.mxu0 0
    %222 = vmatpush1.bf16.msra.mxu0 %v182
    %223 = vmatprep.subr.bf16.mxu0 0
    %224 = vmatpush1.bf16.msra.mxu0 %v183
    %225 = vmatprep.subr.bf16.mxu0 0
    %226 = vmatpush1.bf16.msra.mxu0 %v184
    %227 = vmatprep.subr.bf16.mxu0 0
    %228 = vmatpush1.bf16.msra.mxu0 %v185
    %229 = vmatprep.subr.bf16.mxu0 0
    %230 = vmatpush1.bf16.msra.mxu0 %v186
    %231 = vmatprep.subr.bf16.mxu0 0
    %232 = vmatpush1.bf16.msra.mxu0 %v187
    %233 = vmatprep.subr.bf16.mxu0 0
    %234 = vmatpush1.bf16.msra.mxu0 %v188
    %235 = vmatprep.subr.bf16.mxu0 0
    %236 = vmatpush1.bf16.msra.mxu0 %v189
    %237 = vmatprep.subr.bf16.mxu0 0
    %238 = vmatpush1.bf16.msra.mxu0 %v190
    %239 = vmatprep.mubr.bf16.mxu0 %v108
    %240 = vmatmul.mubr.bf16.gmra.mrb[0].mxu0 %v107
    %v241 = vpop.f32.mrb[0].mxu0
    %v242 = vadd.f32 %v99, %v241
    %v243 = vpop.f32.mrb[0].mxu0
    %v244 = vpop.f32.mrb[0].mxu0
    %v245 = vadd.f32 %v99, %v244
    %v246 = vpop.f32.mrb[0].mxu0
    %247 = vdwg.mxu0
    %v248 = vmul.f32 %v242, %v242
    %v249 = vmul.f32 %v245, %v245
    %250 = vadd.xlane.f32.xlu0 %v248
    %v251 = vpop.xlane.xlu0 %250
    %252 = vadd.xlane.f32.xlu0 %v249
    %v253 = vpop.xlane.xlu0 %252
    %v254 = vadd.f32 %v251, 1e-12
    %v255 = vadd.f32 %v253, 1e-12
    %v256 = vrsqrt.pop %v254
    %v257 = vrsqrt.pop %v255
    %v258 = vmul.f32 %v242, %v256
    %v259 = vmul.f32 %v245, %v257
    %v260 = vpack.c.bf16 %v259, %v258
    %v261 = vld [vmem:[#allocation7] sm:$0xf]
    %v262 = vld [vmem:[#allocation7 + $0x4] sm:$0xf]
    %v263 = vld [vmem:[#allocation7 + $0x8] sm:$0xf]
    %v264 = vld [vmem:[#allocation7 + $0xc] sm:$0xf]
    %v265 = vld [vmem:[#allocation7 + $0x10] sm:$0xf]
    %v266 = vld [vmem:[#allocation7 + $0x14] sm:$0xf]
    %v267 = vld [vmem:[#allocation7 + $0x18] sm:$0xf]
    %v268 = vld [vmem:[#allocation7 + $0x1c] sm:$0xf]
    %v269 = vld [vmem:[#allocation7 + $0x20] sm:$0xf]
    %v270 = vld [vmem:[#allocation7 + $0x24] sm:$0xf]
    %v271 = vld [vmem:[#allocation7 + $0x28] sm:$0xf]
    %v272 = vld [vmem:[#allocation7 + $0x2c] sm:$0xf]
    %v273 = vld [vmem:[#allocation7 + $0x30] sm:$0xf]
    %v274 = vld [vmem:[#allocation7 + $0x34] sm:$0xf]
    %v275 = vld [vmem:[#allocation7 + $0x38] sm:$0xf]
    %v276 = vld [vmem:[#allocation7 + $0x3c] sm:$0xf]
    %v293 = vunpack.c.l.b16 %v261
    %v294 = vunpack.c.l.b16 %v262
    %v295 = vunpack.c.l.b16 %v263
    %v296 = vunpack.c.l.b16 %v264
    %v297 = vunpack.c.l.b16 %v265
    %v298 = vunpack.c.l.b16 %v266
    %v299 = vunpack.c.l.b16 %v267
    %v300 = vunpack.c.l.b16 %v268
    %v301 = vunpack.c.l.b16 %v269
    %v302 = vunpack.c.l.b16 %v270
    %v303 = vunpack.c.l.b16 %v271
    %v304 = vunpack.c.l.b16 %v272
    %v305 = vunpack.c.l.b16 %v273
    %v306 = vunpack.c.l.b16 %v274
    %v307 = vunpack.c.l.b16 %v275
    %v308 = vunpack.c.l.b16 %v276
    %v309 = vpack.c.b16 %v294, %v293
    %v310 = vpack.c.b16 %v296, %v295
    %v311 = vpack.c.b16 %v298, %v297
    %v312 = vpack.c.b16 %v300, %v299
    %v313 = vpack.c.b16 %v302, %v301
    %v314 = vpack.c.b16 %v304, %v303
    %v315 = vpack.c.b16 %v306, %v305
    %v316 = vpack.c.b16 %v308, %v307
    %325 = vmatprep.subr.bf16.mxu0 0
    %326 = vmatpush1.bf16.msra.mxu0 %v309
    %327 = vmatprep.subr.bf16.mxu0 0
    %328 = vmatpush1.bf16.msra.mxu0 %v310
    %329 = vmatprep.subr.bf16.mxu0 0
    %330 = vmatpush1.bf16.msra.mxu0 %v311
    %331 = vmatprep.subr.bf16.mxu0 0
    %332 = vmatpush1.bf16.msra.mxu0 %v312
    %333 = vmatprep.subr.bf16.mxu0 0
    %334 = vmatpush1.bf16.msra.mxu0 %v313
    %335 = vmatprep.subr.bf16.mxu0 0
    %336 = vmatpush1.bf16.msra.mxu0 %v314
    %337 = vmatprep.subr.bf16.mxu0 0
    %338 = vmatpush1.bf16.msra.mxu0 %v315
    %339 = vmatprep.subr.bf16.mxu0 0
    %340 = vmatpush1.bf16.msra.mxu0 %v316
    %341 = vmatprep.subr.bf16.mxu0 0
    %342 = vmatpush1.bf16.msra.mxu0 0
    %343 = vmatprep.subr.bf16.mxu0 0
    %344 = vmatpush1.bf16.msra.mxu0 0
    %345 = vmatprep.subr.bf16.mxu0 0
    %346 = vmatpush1.bf16.msra.mxu0 0
    %347 = vmatprep.subr.bf16.mxu0 0
    %348 = vmatpush1.bf16.msra.mxu0 0
    %349 = vmatprep.subr.bf16.mxu0 0
    %350 = vmatpush1.bf16.msra.mxu0 0
    %351 = vmatprep.subr.bf16.mxu0 0
    %352 = vmatpush1.bf16.msra.mxu0 0
    %353 = vmatprep.subr.bf16.mxu0 0
    %354 = vmatpush1.bf16.msra.mxu0 0
    %355 = vmatprep.subr.bf16.mxu0 0
    %356 = vmatpush1.bf16.msra.mxu0 0
    %357 = vmatprep.mubr.bf16.mxu0 0
    %358 = vmatmul.mubr.bf16.gmra.mrb[0].mxu0 %v260
    %v359 = vpop.f32.mrb[0].mxu0
    %v360 = vadd.f32 0.0, %v359
    %v361 = vpop.f32.mrb[0].mxu0
    %v362 = vpop.f32.mrb[0].mxu0
    %v363 = vadd.f32 0.0, %v362
    %v364 = vpop.f32.mrb[0].mxu0
    %365 = vdwg.mxu0
    %366 = vst [vmem:[#allocation8] sm:$0xff] %v360
    %367 = vst [vmem:[#allocation8 + $0x8] sm:$0xff] %v363
    // Predicated region
    $region30: #{tpu_custom_call.1} parent=1 // pred_check
      _
    $region31: #{tpu_custom_call.1} parent=1 // pred_check_branch
      %369 = sbr.rel (0) target = $region33
    $region32: #{tpu_custom_call.1} parent=1 // pred_region
      %s371 = ssub.s32 256, 256
      %372 = vsyncadd [#allocation4], %s371
      %s373 = sshll.u32 [#allocation8], 4
      %s374 = int_to_ptr.vmem [resolvable:$true] %s373
      %379 = dma.vmem_to_hbm [thread:$0]  %s374, 256, %s4, [#allocation4], 128, 128, 8
    $region33: #{tpu_custom_call.1} parent=1 // pred_fallthru
      _
    // Predicated region
    $region34: #{tpu_custom_call.1} parent=1 // pred_check
      _
    $region35: #{tpu_custom_call.1} parent=1 // pred_check_branch
      %381 = sbr.rel (0) target = $region37
    $region36: #{tpu_custom_call.1} parent=1 // pred_region
      %382 = dma.done [#allocation4], 256
    $region37: #{tpu_custom_call.1} parent=1 // pred_fallthru
      _
    %383 = vsyncpa [#allocation3], 1
    %384 = vsyncpa [#allocation6], 1
    %385 = vsyncpa [#allocation4], 1

</llo_original>
